<compile_context>
chip_gen: v7x
topology: tpu7x:2x2x1
jax: 0.10.0
libtpu: 0.0.40
codegen_flags: <defaults>
</compile_context>

<pallas_src>
import functools
import math

import jax
import jax.numpy as jnp
import numpy as np
from jax.experimental import pallas as pl
from jax.experimental.pallas import tpu as pltpu

# ---- "cfg" constants (deterministic, synthetic) -----------------------------
NCLASSES = 2
SMOOTH_L1_SIGMA = 3.0
WEIGHT_SCORES = 1.0
WEIGHT_ROIS = 0.1

LANES = 128


def _round_up(x, m):
    return (x + m - 1) // m * m


def _chip_config():
    """Returns (ncores, target CE rows per step, explicit vmem limit or None).

    Detection only gates performance, never correctness: unknown chips fall
    back to a configuration that is safe everywhere (1 core, 512-row blocks,
    default scoped-VMEM limit)."""
    try:
        kind = jax.devices()[0].device_kind.lower()
    except Exception:  # pragma: no cover - defensive
        kind = ""
    if "v7" in kind:            # 2 TensorCores, 64 MiB VMEM, ~3.2 TB/s HBM
        return 2, 2048, 40 << 20
    if "v6" in kind:            # 1 TensorCore, 128 MiB VMEM
        return 1, 2048, 36 << 20
    # v5e / unknown: stay under the 16 MiB scoped-VMEM default.
    return 1, 512, None


# -----------------------------------------------------------------------------
# Kernel: one grid step accumulates lane-wise partial sums
# [sum_ce, n_valid, sum_sl1] into the per-core (3, 1, 128) output block.
# -----------------------------------------------------------------------------
def _loss_kernel(s_ref, t_ref, r_ref, rt_ref, rm_ref, out_ref, *,
                 sigma, n_blocks, roi_rows, roi_block_rows):
    c = pl.program_id(0)
    i = pl.program_id(1)
    b = c * pl.num_programs(1) + i          # true (unclamped) block index

    @pl.when(i == 0)
    def _():
        out_ref[...] = jnp.zeros_like(out_ref)

    # When the megacore grid has one more step than real blocks, the index_maps
    # clamp that step onto the last block; zero out its contribution here.
    step_valid = b < n_blocks

    # ---- 2-class cross entropy (ignore_index=-1), stable softplus form ------
    # s_ref block is (k, 2, rpp, 128): class planes are selected by a leading
    # dim index, which is a free vreg-slab select (no XLU, no relayout).
    s = s_ref[...]
    s0 = s[:, 0]                            # (k, rpp, 128) class-0 logits
    s1 = s[:, 1]                            # (k, rpp, 128) class-1 logits
    t = t_ref[...].astype(jnp.int32)        # (k, rpp, 128) targets in {-1,0,1}
    # Targets are plane-padded with -1, so garbage rows of a ragged scores
    # block are ignored here without any extra mask.
    valid = jnp.logical_and(t != -1, step_valid)
    x = jnp.where(t == 1, s0 - s1, s1 - s0)                     # s_other - s_target
    sp = jnp.maximum(x, 0.0) + jnp.log(1.0 + jnp.exp(-jnp.abs(x)))  # softplus(x)
    ce = jnp.where(valid, sp, 0.0)
    nv = valid.astype(jnp.float32)

    # ---- masked SmoothL1 over the flat ROI stream ----------------------------
    # Ragged tail / redundant-step handling: rows past the true end of the ROI
    # stream are undefined (no zero-fill), so mask with an explicit row index.
    rows_valid = jnp.clip(roi_rows - b * roi_block_rows, 0, roi_block_rows)
    row_ok = jax.lax.broadcasted_iota(jnp.int32, r_ref.shape, 0) < rows_valid
    sigma2 = sigma * sigma
    diff = jnp.abs(rt_ref[...] - r_ref[...]) * rm_ref[...].astype(jnp.float32)
    sl1 = jnp.where(diff < 1.0 / sigma2,
                    (0.5 * sigma2) * diff * diff,
                    diff - 0.5 / sigma2)
    sl1 = jnp.where(row_ok, sl1, 0.0)

    # ---- lane-wise partial sums (leading-dim + sublane adds only) ------------
    out_ref[0, 0] = out_ref[0, 0] + ce.sum(axis=0).sum(axis=0, keepdims=True)
    out_ref[0, 1] = out_ref[0, 1] + nv.sum(axis=0).sum(axis=0, keepdims=True)
    out_ref[0, 2] = out_ref[0, 2] + sl1.sum(axis=0, keepdims=True)


# -----------------------------------------------------------------------------
# JAX glue: free reshapes (no pad/transpose copies on the %128-aligned path),
# chip-dependent grid/block, final tiny combine.  Everything under one jit.
# -----------------------------------------------------------------------------
@functools.partial(jax.jit, static_argnames=("sigma", "w_scores", "w_rois"))
def proposal_loss(scores_nchw, rois_nchw, scores_target_nhw, rois_target_nchw,
                  rois_mask_nchw, *, sigma=SMOOTH_L1_SIGMA,
                  w_scores=WEIGHT_SCORES, w_rois=WEIGHT_ROIS):
    """scores_nchw:       (B, 2*A, H, W) f32
       rois_nchw:         (B, 4*A, H, W) f32
       scores_target_nhw: (B*A, H, W)    int (values in {-1, 0, 1}; int8 ok)
       rois_target_nchw:  (B, 4*A, H, W) f32
       rois_mask_nchw:    (B, 4*A, H, W) float (binary; bf16 ok)
    """
    B, C2, H, W = scores_nchw.shape
    A = C2 // NCLASSES
    n_anchor = B * A
    hw = H * W
    rpp = pl.cdiv(hw, LANES)                 # 128-lane rows per (H, W) plane

    ncores, rows_target, vmem_limit = _chip_config()

    # Anchors per CE block.  Keep k*rpp a multiple of 8 so the flat ROI block
    # (4*k*rpp, 128) satisfies the sublane-tiling rule for f32/bf16/int8.
    step = 8 // math.gcd(rpp, 8)
    k = max(1, min(rows_target // max(rpp, 1), n_anchor))
    k = _round_up(k, step)
    n_blocks = pl.cdiv(n_anchor, k)
    steps_per_core = pl.cdiv(n_blocks, ncores)
    n_pad_anchor = n_blocks * k              # targets are padded to this many planes

    roi_block_rows = 4 * k * rpp             # ROI rows per block (multiple of 32)
    n_roi = 4 * n_anchor
    roi_rows = n_roi * rpp                   # total 128-wide ROI rows

    # ---- layout packing: free reshapes when H*W % 128 == 0 ------------------
    def to_rows(x, n_planes, fill):
        x = x.reshape(n_planes, hw)
        pad = rpp * LANES - hw
        if pad:
            # TODO(synk): only non-%128 spatial sizes pay this per-plane pad copy.
            x = jnp.pad(x, ((0, 0), (0, pad)), constant_values=fill)
        return x

    s4 = to_rows(scores_nchw, n_anchor * 2, 0.0).reshape(n_anchor, 2, rpp, LANES)
    t = to_rows(scores_target_nhw, n_anchor, -1)
    if n_pad_anchor > n_anchor:
        # Pad only the (smallest) target array with -1 so the ragged tail of the
        # scores block is ignored by ignore_index — no mask needed in-kernel.
        t = jnp.pad(t, ((0, n_pad_anchor - n_anchor), (0, 0)), constant_values=-1)
    t3 = t.reshape(n_pad_anchor, rpp, LANES)
    r2 = to_rows(rois_nchw, n_roi, 0.0).reshape(roi_rows, LANES)
    rt2 = to_rows(rois_target_nchw, n_roi, 0.0).reshape(roi_rows, LANES)
    rm2 = to_rows(rois_mask_nchw, n_roi, 0.0).reshape(roi_rows, LANES)

    # ---- scoped-VMEM budget: double-buffered inputs + small output + slack ---
    bytes_per_step = (k * 2 * rpp * LANES * 4
                      + k * rpp * LANES * t3.dtype.itemsize
                      + roi_block_rows * LANES * (4 + 4 + rm2.dtype.itemsize))
    needed = 2 * bytes_per_step + (2 << 20)
    if vmem_limit is None:
        if needed > (12 << 20):
            vmem_limit = min(needed, 48 << 20)
    else:
        vmem_limit = min(max(vmem_limit, needed), 48 << 20)

    kernel = functools.partial(_loss_kernel, sigma=float(sigma),
                               n_blocks=n_blocks, roi_rows=roi_rows,
                               roi_block_rows=roi_block_rows)

    def blk(c, i):
        # Clamp so a possible extra megacore step never issues a fully
        # out-of-bounds DMA; the kernel zeroes its contribution.
        return jnp.minimum(c * steps_per_core + i, n_blocks - 1)

    parts = pl.pallas_call(
        kernel,
        out_shape=jax.ShapeDtypeStruct((ncores, 3, 1, LANES), jnp.float32),
        grid=(ncores, steps_per_core),
        in_specs=[
            pl.BlockSpec((k, 2, rpp, LANES), lambda c, i: (blk(c, i), 0, 0, 0)),  # scores
            pl.BlockSpec((k, rpp, LANES), lambda c, i: (blk(c, i), 0, 0)),        # targets
            pl.BlockSpec((roi_block_rows, LANES), lambda c, i: (blk(c, i), 0)),   # rois
            pl.BlockSpec((roi_block_rows, LANES), lambda c, i: (blk(c, i), 0)),   # rois_target
            pl.BlockSpec((roi_block_rows, LANES), lambda c, i: (blk(c, i), 0)),   # rois_mask
        ],
        out_specs=pl.BlockSpec((1, 3, 1, LANES), lambda c, i: (c, 0, 0, 0)),
        compiler_params=pltpu.CompilerParams(
            dimension_semantics=("parallel", "arbitrary"),
            vmem_limit_bytes=vmem_limit),
    )(s4, t3, r2, rt2, rm2)

    totals = jnp.sum(parts, axis=(0, 2, 3))      # [sum_ce, n_valid, sum_sl1]
    # Note: if n_valid == 0 this yields NaN, matching nn.CrossEntropyLoss.
    scores_loss = totals[0] / totals[1]
    rois_loss = totals[2]
    return w_scores * scores_loss + w_rois * rois_loss


# ----------------------------- reference (pure JAX) ---------------------------
def proposal_loss_ref(scores_nchw, rois_nchw, scores_target_nhw, rois_target_nchw,
                      rois_mask_nchw, sigma=SMOOTH_L1_SIGMA,
                      w_scores=WEIGHT_SCORES, w_rois=WEIGHT_ROIS):
    B, C2, H, W = scores_nchw.shape
    A = C2 // 2
    s = scores_nchw.reshape(B * A, 2, H, W)
    logp = jax.nn.log_softmax(s, axis=1)
    t = scores_target_nhw.astype(jnp.int32)
    valid = t != -1
    tc = jnp.clip(t, 0, 1)
    picked = jnp.take_along_axis(logp, tc[:, None, :, :], axis=1)[:, 0]
    ce = jnp.where(valid, -picked, 0.0)
    scores_loss = jnp.sum(ce) / jnp.sum(valid.astype(jnp.float32))

    m = rois_mask_nchw.astype(jnp.float32)
    r = rois_nchw * m
    rt = rois_target_nchw * m
    sigma2 = sigma * sigma
    diff = jnp.abs(rt - r)
    sl1 = jnp.where(diff < 1.0 / sigma2, 0.5 * sigma2 * diff * diff,
                    diff - 0.5 / sigma2)
    rois_loss = jnp.sum(sl1)
    return w_scores * scores_loss + w_rois * rois_loss


# ----------------------------------- main -------------------------------------
if __name__ == "__main__":
    key = jax.random.PRNGKey(0)
    kS, kR, kT, kRT, kM = jax.random.split(key, 5)

    B, A, H, W = 2, 2, 16, 16   # scores: (2, 4, 16, 16), rois: (2, 8, 16, 16)

    scores = jax.random.normal(kS, (B, 2 * A, H, W), dtype=jnp.float32)
    rois = jax.random.normal(kR, (B, 4 * A, H, W), dtype=jnp.float32)

    # Synthetic stand-ins for BuildTargetsFunction / PruneFunction outputs,
    # produced directly in the narrow dtypes the kernel streams (int8 / bf16).
    scores_target = jax.random.randint(kT, (B * A, H, W), -1, 2,
                                       dtype=jnp.int32).astype(jnp.int8)
    rois_target = jax.random.normal(kRT, (B, 4 * A, H, W), dtype=jnp.float32)
    rois_mask = (jax.random.uniform(kM, (B, 4 * A, H, W)) > 0.5).astype(jnp.bfloat16)

    loss = proposal_loss(scores, rois, scores_target, rois_target, rois_mask)
    loss = jax.block_until_ready(loss)

    ref = proposal_loss_ref(scores, rois, scores_target, rois_target, rois_mask)
    np.testing.assert_allclose(np.asarray(loss), np.asarray(ref), rtol=5e-5, atol=5e-5)

    print("KERNEL_OK")
</pallas_src>

<mosaic_0001>
module attributes {stable_mosaic.version = 11 : i64} {
  func.func @_loss_kernel(%arg0: i32, %arg1: i32, %arg2: memref<4x2x2x128xf32, #tpu.memory_space<vmem>>, %arg3: memref<4x2x128xi8, #tpu.memory_space<vmem>>, %arg4: memref<32x128xf32, #tpu.memory_space<vmem>>, %arg5: memref<32x128xf32, #tpu.memory_space<vmem>>, %arg6: memref<32x128xbf16, #tpu.memory_space<vmem>>, %arg7: memref<1x3x1x128xf32, #tpu.memory_space<vmem>>) attributes {dimension_semantics = [#tpu.dimension_semantics<parallel>, #tpu.dimension_semantics<arbitrary>], iteration_bounds = array<i64: 1, 1>, scalar_prefetch = 0 : i64, scratch_operands = 0 : i64, tpu.core_type = #tpu.core_type<tc>, window_params = [{transform_indices = @transform_0, window_bounds = array<i64: 4, 2, 2, 128>}, {transform_indices = @transform_1, window_bounds = array<i64: 4, 2, 128>}, {transform_indices = @transform_2, window_bounds = array<i64: 32, 128>}, {transform_indices = @transform_3, window_bounds = array<i64: 32, 128>}, {transform_indices = @transform_4, window_bounds = array<i64: 32, 128>}, {transform_indices = @transform_5, window_bounds = array<i64: 1, 3, 1, 128>}]} {
    %c1_i32 = arith.constant 1 : i32
    %0 = arith.muli %arg0, %c1_i32 : i32
    %1 = arith.addi %0, %arg1 : i32
    %c0_i32 = arith.constant 0 : i32
    %2 = arith.cmpi eq, %arg1, %c0_i32 : i32
    %3 = arith.extui %2 : i1 to i32
    %c0_i32_0 = arith.constant 0 : i32
    %4 = arith.cmpi ne, %3, %c0_i32_0 : i32
    scf.if %4 {
      %cst_52 = arith.constant 0.000000e+00 : f32
      %86 = vector.broadcast %cst_52 : f32 to vector<1x3x1x128xf32>
      %c0_53 = arith.constant 0 : index
      %c0_54 = arith.constant 0 : index
      %c0_55 = arith.constant 0 : index
      %c0_56 = arith.constant 0 : index
      %87 = vector.load %arg7[%c0_53, %c0_54, %c0_55, %c0_56] : memref<1x3x1x128xf32, #tpu.memory_space<vmem>>, vector<1x3x1x128xf32>
      tpu.vector_store %arg7[%c0_53, %c0_54, %c0_55, %c0_56], %86 {strides = array<i32>} : memref<1x3x1x128xf32, #tpu.memory_space<vmem>>, vector<1x3x1x128xf32>,
    } else {
    }
    %c1_i32_1 = arith.constant 1 : i32
    %5 = arith.cmpi slt, %1, %c1_i32_1 : i32
    %c0 = arith.constant 0 : index
    %c0_2 = arith.constant 0 : index
    %c0_3 = arith.constant 0 : index
    %c0_4 = arith.constant 0 : index
    %6 = vector.load %arg2[%c0, %c0_2, %c0_3, %c0_4] : memref<4x2x2x128xf32, #tpu.memory_space<vmem>>, vector<4x2x2x128xf32>
    %7 = vector.extract_strided_slice %6 {offsets = [0, 0, 0, 0], sizes = [4, 1, 2, 128], strides = [1, 1, 1, 1]} : vector<4x2x2x128xf32> to vector<4x1x2x128xf32>
    %8 = vector.shape_cast %7 : vector<4x1x2x128xf32> to vector<4x2x128xf32>
    %9 = vector.extract_strided_slice %6 {offsets = [0, 1, 0, 0], sizes = [4, 1, 2, 128], strides = [1, 1, 1, 1]} : vector<4x2x2x128xf32> to vector<4x1x2x128xf32>
    %10 = vector.shape_cast %9 : vector<4x1x2x128xf32> to vector<4x2x128xf32>
    %c0_5 = arith.constant 0 : index
    %c0_6 = arith.constant 0 : index
    %c0_7 = arith.constant 0 : index
    %11 = vector.load %arg3[%c0_5, %c0_6, %c0_7] : memref<4x2x128xi8, #tpu.memory_space<vmem>>, vector<4x2x128xi8>
    %12 = arith.extsi %11 : vector<4x2x128xi8> to vector<4x2x128xi32>
    %c-1_i32 = arith.constant -1 : i32
    %13 = vector.broadcast %c-1_i32 : i32 to vector<4x2x128xi32>
    %14 = arith.cmpi ne, %12, %13 : vector<4x2x128xi32>
    %15 = vector.broadcast %5 : i1 to vector<4x2x128xi1>
    %16 = arith.andi %14, %15 : vector<4x2x128xi1>
    %c1_i32_8 = arith.constant 1 : i32
    %17 = vector.broadcast %c1_i32_8 : i32 to vector<4x2x128xi32>
    %18 = arith.cmpi eq, %12, %17 : vector<4x2x128xi32>
    %19 = arith.subf %8, %10 : vector<4x2x128xf32>
    %20 = arith.subf %10, %8 : vector<4x2x128xf32>
    %21 = arith.select %18, %19, %20 : vector<4x2x128xi1>, vector<4x2x128xf32>
    %cst = arith.constant 0.000000e+00 : f32
    %22 = vector.broadcast %cst : f32 to vector<4x2x128xf32>
    %23 = arith.maximumf %21, %22 : vector<4x2x128xf32>
    %24 = math.absf %21 : vector<4x2x128xf32>
    %cst_9 = arith.constant 0.000000e+00 : f32
    %25 = vector.broadcast %cst_9 : f32 to vector<4x2x128xf32>
    %26 = arith.subf %25, %24 : vector<4x2x128xf32>
    %27 = math.exp %26 : vector<4x2x128xf32>
    %cst_10 = arith.constant 1.000000e+00 : f32
    %28 = vector.broadcast %cst_10 : f32 to vector<4x2x128xf32>
    %29 = arith.addf %28, %27 : vector<4x2x128xf32>
    %30 = math.log %29 : vector<4x2x128xf32>
    %31 = arith.addf %23, %30 : vector<4x2x128xf32>
    %cst_11 = arith.constant 0.000000e+00 : f32
    %32 = vector.broadcast %cst_11 : f32 to vector<4x2x128xf32>
    %33 = arith.select %16, %31, %32 : vector<4x2x128xi1>, vector<4x2x128xf32>
    %34 = arith.extui %16 : vector<4x2x128xi1> to vector<4x2x128xi32>
    %35 = arith.sitofp %34 : vector<4x2x128xi32> to vector<4x2x128xf32>
    %c32_i32 = arith.constant 32 : i32
    %36 = arith.muli %1, %c32_i32 : i32
    %c32_i32_12 = arith.constant 32 : i32
    %37 = arith.subi %c32_i32_12, %36 : i32
    %c0_i32_13 = arith.constant 0 : i32
    %c32_i32_14 = arith.constant 32 : i32
    %38 = arith.maxsi %c0_i32_13, %37 : i32
    %39 = arith.minsi %c32_i32_14, %38 : i32
    %40 = tpu.iota {dimensions = array<i32: 0>} : vector<32x128xi32>
    %41 = vector.broadcast %39 : i32 to vector<32x128xi32>
    %42 = arith.cmpi slt, %40, %41 : vector<32x128xi32>
    %c0_15 = arith.constant 0 : index
    %c0_16 = arith.constant 0 : index
    %43 = vector.load %arg5[%c0_15, %c0_16] : memref<32x128xf32, #tpu.memory_space<vmem>>, vector<32x128xf32>
    %c0_17 = arith.constant 0 : index
    %c0_18 = arith.constant 0 : index
    %44 = vector.load %arg4[%c0_17, %c0_18] : memref<32x128xf32, #tpu.memory_space<vmem>>, vector<32x128xf32>
    %45 = arith.subf %43, %44 : vector<32x128xf32>
    %46 = math.absf %45 : vector<32x128xf32>
    %c0_19 = arith.constant 0 : index
    %c0_20 = arith.constant 0 : index
    %47 = vector.load %arg6[%c0_19, %c0_20] : memref<32x128xbf16, #tpu.memory_space<vmem>>, vector<32x128xbf16>
    %48 = arith.extf %47 : vector<32x128xbf16> to vector<32x128xf32>
    %49 = arith.mulf %46, %48 : vector<32x128xf32>
    %cst_21 = arith.constant 0.111111112 : f32
    %50 = vector.broadcast %cst_21 : f32 to vector<32x128xf32>
    %51 = arith.cmpf olt, %49, %50 : vector<32x128xf32>
    %cst_22 = arith.constant 4.500000e+00 : f32
    %52 = vector.broadcast %cst_22 : f32 to vector<32x128xf32>
    %53 = arith.mulf %52, %49 : vector<32x128xf32>
    %54 = arith.mulf %53, %49 : vector<32x128xf32>
    %cst_23 = arith.constant 0.055555556 : f32
    %55 = vector.broadcast %cst_23 : f32 to vector<32x128xf32>
    %56 = arith.subf %49, %55 : vector<32x128xf32>
    %57 = arith.select %51, %54, %56 : vector<32x128xi1>, vector<32x128xf32>
    %cst_24 = arith.constant 0.000000e+00 : f32
    %58 = vector.broadcast %cst_24 : f32 to vector<32x128xf32>
    %59 = arith.select %42, %57, %58 : vector<32x128xi1>, vector<32x128xf32>
    %c0_25 = arith.constant 0 : index
    %c0_26 = arith.constant 0 : index
    %c0_27 = arith.constant 0 : index
    %c0_28 = arith.constant 0 : index
    %60 = vector.load %arg7[%c0_25, %c0_26, %c0_27, %c0_28] : memref<1x3x1x128xf32, #tpu.memory_space<vmem>>, vector<1x1x1x128xf32>
    %61 = vector.shape_cast %60 : vector<1x1x1x128xf32> to vector<1x128xf32>
    %cst_29 = arith.constant dense<0.000000e+00> : vector<2x128xf32>
    %62 = vector.multi_reduction <add>, %33, %cst_29 [0] : vector<4x2x128xf32> to vector<2x128xf32>
    %cst_30 = arith.constant dense<0.000000e+00> : vector<128xf32>
    %63 = vector.multi_reduction <add>, %62, %cst_30 [0] : vector<2x128xf32> to vector<128xf32>
    %64 = vector.shape_cast %63 : vector<128xf32> to vector<1x128xf32>
    %65 = arith.addf %61, %64 : vector<1x128xf32>
    %c0_31 = arith.constant 0 : index
    %c0_32 = arith.constant 0 : index
    %c0_33 = arith.constant 0 : index
    %c0_34 = arith.constant 0 : index
    %66 = vector.load %arg7[%c0_31, %c0_32, %c0_33, %c0_34] : memref<1x3x1x128xf32, #tpu.memory_space<vmem>>, vector<1x1x1x128xf32>
    %67 = vector.shape_cast %66 : vector<1x1x1x128xf32> to vector<1x128xf32>
    %68 = vector.shape_cast %65 : vector<1x128xf32> to vector<1x1x1x128xf32>
    tpu.vector_store %arg7[%c0_31, %c0_32, %c0_33, %c0_34], %68 {strides = array<i32>} : memref<1x3x1x128xf32, #tpu.memory_space<vmem>>, vector<1x1x1x128xf32>,
    %c0_35 = arith.constant 0 : index
    %c1 = arith.constant 1 : index
    %c0_36 = arith.constant 0 : index
    %c0_37 = arith.constant 0 : index
    %69 = vector.load %arg7[%c0_35, %c1, %c0_36, %c0_37] : memref<1x3x1x128xf32, #tpu.memory_space<vmem>>, vector<1x1x1x128xf32>
    %70 = vector.shape_cast %69 : vector<1x1x1x128xf32> to vector<1x128xf32>
    %cst_38 = arith.constant dense<0.000000e+00> : vector<2x128xf32>
    %71 = vector.multi_reduction <add>, %35, %cst_38 [0] : vector<4x2x128xf32> to vector<2x128xf32>
    %cst_39 = arith.constant dense<0.000000e+00> : vector<128xf32>
    %72 = vector.multi_reduction <add>, %71, %cst_39 [0] : vector<2x128xf32> to vector<128xf32>
    %73 = vector.shape_cast %72 : vector<128xf32> to vector<1x128xf32>
    %74 = arith.addf %70, %73 : vector<1x128xf32>
    %c0_40 = arith.constant 0 : index
    %c1_41 = arith.constant 1 : index
    %c0_42 = arith.constant 0 : index
    %c0_43 = arith.constant 0 : index
    %75 = vector.load %arg7[%c0_40, %c1_41, %c0_42, %c0_43] : memref<1x3x1x128xf32, #tpu.memory_space<vmem>>, vector<1x1x1x128xf32>
    %76 = vector.shape_cast %75 : vector<1x1x1x128xf32> to vector<1x128xf32>
    %77 = vector.shape_cast %74 : vector<1x128xf32> to vector<1x1x1x128xf32>
    tpu.vector_store %arg7[%c0_40, %c1_41, %c0_42, %c0_43], %77 {strides = array<i32>} : memref<1x3x1x128xf32, #tpu.memory_space<vmem>>, vector<1x1x1x128xf32>,
    %c0_44 = arith.constant 0 : index
    %c2 = arith.constant 2 : index
    %c0_45 = arith.constant 0 : index
    %c0_46 = arith.constant 0 : index
    %78 = vector.load %arg7[%c0_44, %c2, %c0_45, %c0_46] : memref<1x3x1x128xf32, #tpu.memory_space<vmem>>, vector<1x1x1x128xf32>
    %79 = vector.shape_cast %78 : vector<1x1x1x128xf32> to vector<1x128xf32>
    %cst_47 = arith.constant dense<0.000000e+00> : vector<128xf32>
    %80 = vector.multi_reduction <add>, %59, %cst_47 [0] : vector<32x128xf32> to vector<128xf32>
    %81 = vector.shape_cast %80 : vector<128xf32> to vector<1x128xf32>
    %82 = arith.addf %79, %81 : vector<1x128xf32>
    %c0_48 = arith.constant 0 : index
    %c2_49 = arith.constant 2 : index
    %c0_50 = arith.constant 0 : index
    %c0_51 = arith.constant 0 : index
    %83 = vector.load %arg7[%c0_48, %c2_49, %c0_50, %c0_51] : memref<1x3x1x128xf32, #tpu.memory_space<vmem>>, vector<1x1x1x128xf32>
    %84 = vector.shape_cast %83 : vector<1x1x1x128xf32> to vector<1x128xf32>
    %85 = vector.shape_cast %82 : vector<1x128xf32> to vector<1x1x1x128xf32>
    tpu.vector_store %arg7[%c0_48, %c2_49, %c0_50, %c0_51], %85 {strides = array<i32>} : memref<1x3x1x128xf32, #tpu.memory_space<vmem>>, vector<1x1x1x128xf32>,
    return
  }
  func.func @transform_0(%arg0: i32, %arg1: i32) -> (i32, i32, i32, i32) {
    %c1_i32 = arith.constant 1 : i32
    %0 = arith.muli %arg0, %c1_i32 : i32
    %1 = arith.addi %0, %arg1 : i32
    %c0_i32 = arith.constant 0 : i32
    %2 = arith.minsi %1, %c0_i32 : i32
    %c0_i32_0 = arith.constant 0 : i32
    %c0_i32_1 = arith.constant 0 : i32
    %c0_i32_2 = arith.constant 0 : i32
    %c0_i32_3 = arith.constant 0 : i32
    return %2, %c0_i32_0, %c0_i32_1, %c0_i32_2 : i32, i32, i32, i32
  }
  func.func @transform_1(%arg0: i32, %arg1: i32) -> (i32, i32, i32) {
    %c1_i32 = arith.constant 1 : i32
    %0 = arith.muli %arg0, %c1_i32 : i32
    %1 = arith.addi %0, %arg1 : i32
    %c0_i32 = arith.constant 0 : i32
    %2 = arith.minsi %1, %c0_i32 : i32
    %c0_i32_0 = arith.constant 0 : i32
    %c0_i32_1 = arith.constant 0 : i32
    %c0_i32_2 = arith.constant 0 : i32
    return %2, %c0_i32_0, %c0_i32_1 : i32, i32, i32
  }
  func.func @transform_2(%arg0: i32, %arg1: i32) -> (i32, i32) {
    %c1_i32 = arith.constant 1 : i32
    %0 = arith.muli %arg0, %c1_i32 : i32
    %1 = arith.addi %0, %arg1 : i32
    %c0_i32 = arith.constant 0 : i32
    %2 = arith.minsi %1, %c0_i32 : i32
    %c0_i32_0 = arith.constant 0 : i32
    %c0_i32_1 = arith.constant 0 : i32
    return %2, %c0_i32_0 : i32, i32
  }
  func.func @transform_3(%arg0: i32, %arg1: i32) -> (i32, i32) {
    %c1_i32 = arith.constant 1 : i32
    %0 = arith.muli %arg0, %c1_i32 : i32
    %1 = arith.addi %0, %arg1 : i32
    %c0_i32 = arith.constant 0 : i32
    %2 = arith.minsi %1, %c0_i32 : i32
    %c0_i32_0 = arith.constant 0 : i32
    %c0_i32_1 = arith.constant 0 : i32
    return %2, %c0_i32_0 : i32, i32
  }
  func.func @transform_4(%arg0: i32, %arg1: i32) -> (i32, i32) {
    %c1_i32 = arith.constant 1 : i32
    %0 = arith.muli %arg0, %c1_i32 : i32
    %1 = arith.addi %0, %arg1 : i32
    %c0_i32 = arith.constant 0 : i32
    %2 = arith.minsi %1, %c0_i32 : i32
    %c0_i32_0 = arith.constant 0 : i32
    %c0_i32_1 = arith.constant 0 : i32
    return %2, %c0_i32_0 : i32, i32
  }
  func.func @transform_5(%arg0: i32, %arg1: i32) -> (i32, i32, i32, i32) {
    %c0_i32 = arith.constant 0 : i32
    %c0_i32_0 = arith.constant 0 : i32
    %c0_i32_1 = arith.constant 0 : i32
    %c0_i32_2 = arith.constant 0 : i32
    return %arg0, %c0_i32, %c0_i32_0, %c0_i32_1 : i32, i32, i32, i32
  }
}

</mosaic_0001>

<llo_original>
// kernel: proposal_loss.1
$region0: #{proposal_loss.1}
  #allocation0 [shape = 'u32[]', space=smem, size = 0x4, offset = 0x4, fixed_abs, tag = 'smem constant byte address 0x4 - core index']
  #allocation1 [shape = 'u32[144,128]{1,0:T(1,128)}', space=vmem, size = 0x12000, scoped, tag = 'internal scratch']
  %s0 = inlined_call_operand.vmem [shape: f32[4,2,2,128], index: 0, kind: input, shape index: {}]
  %s1 = inlined_call_operand.vmem [shape: s8[4,2,128], index: 1, kind: input, shape index: {}]
  %s2 = inlined_call_operand.vmem [shape: f32[32,128], index: 2, kind: input, shape index: {}]
  %s3 = inlined_call_operand.vmem [shape: f32[32,128], index: 3, kind: input, shape index: {}]
  %s4 = inlined_call_operand.vmem [shape: bf16[32,128], index: 4, kind: input, shape index: {}]
  %s5 = inlined_call_operand.vmem [shape: f32[1,3,1,128], index: 5, kind: output, shape index: {}]
  %s6 = sld [smem:[#allocation0]]
  $region34: #{proposal_loss.1} parent=0
    _
  %s8 = ssub.s32 1, %s6
  %s9 = scalar_select 0, %s8, %s6
  // Predicated region
  $region2: #{proposal_loss.1} parent=0 // pred_check
    _
  $region3: #{proposal_loss.1} parent=0 // pred_check_branch
    %11 = sbr.rel (0) target = $region5
  $region4: #{proposal_loss.1} parent=0 // pred_region
    %s12 = sadd.s32 0, 0
    %p13 = scmp.lt.s32.totalorder %s12, 0
    %s14 = scalar_select %p13, %s12, 0
    %s15 = smul.u32 4, %s14
    %p16 = scmp.lt.s32.totalorder %s15, 3
    %s17 = scalar_select %p16, %s15, 3
    %s18 = smul.addr %s17, 2
    %s19 = smul.addr %s18, 2
    %s20 = scalar_lea.vmem %s0, %s19
    %s21 = sadd.s32 0, 0
    %p22 = scmp.lt.s32.totalorder %s21, 0
    %s23 = scalar_select %p22, %s21, 0
    %s24 = smul.u32 4, %s23
  $region5: #{proposal_loss.1} parent=0 // pred_fallthru
    _
  // Predicated region
  $region6: #{proposal_loss.1} parent=0 // pred_check
    _
  $region7: #{proposal_loss.1} parent=0 // pred_check_branch
    %26 = sbr.rel (0) target = $region9
  $region8: #{proposal_loss.1} parent=0 // pred_region
    %s27 = sadd.s32 0, 0
    %p28 = scmp.lt.s32.totalorder %s27, 0
    %s29 = scalar_select %p28, %s27, 0
    %s30 = smul.u32 4, %s29
    %p31 = scmp.lt.s32.totalorder %s30, 3
    %s32 = scalar_select %p31, %s30, 3
    %s33 = scalar_lea.vmem %s1, %s32
    %s34 = sadd.s32 0, 0
    %p35 = scmp.lt.s32.totalorder %s34, 0
    %s36 = scalar_select %p35, %s34, 0
    %s37 = smul.u32 4, %s36
  $region9: #{proposal_loss.1} parent=0 // pred_fallthru
    _
  // Predicated region
  $region10: #{proposal_loss.1} parent=0 // pred_check
    _
  $region11: #{proposal_loss.1} parent=0 // pred_check_branch
    %39 = sbr.rel (0) target = $region13
  $region12: #{proposal_loss.1} parent=0 // pred_region
    %s40 = sadd.s32 0, 0
    %p41 = scmp.lt.s32.totalorder %s40, 0
    %s42 = scalar_select %p41, %s40, 0
    %s43 = smul.u32 4, %s42
    %p44 = scmp.lt.s32.totalorder %s43, 3
    %s45 = scalar_select %p44, %s43, 3
    %s46 = smul.addr %s45, 8
    %s47 = scalar_lea.vmem %s2, %s46
    %s48 = sadd.s32 0, 0
    %p49 = scmp.lt.s32.totalorder %s48, 0
    %s50 = scalar_select %p49, %s48, 0
    %s51 = smul.u32 4, %s50
  $region13: #{proposal_loss.1} parent=0 // pred_fallthru
    _
  // Predicated region
  $region14: #{proposal_loss.1} parent=0 // pred_check
    _
  $region15: #{proposal_loss.1} parent=0 // pred_check_branch
    %53 = sbr.rel (0) target = $region17
  $region16: #{proposal_loss.1} parent=0 // pred_region
    %s54 = sadd.s32 0, 0
    %p55 = scmp.lt.s32.totalorder %s54, 0
    %s56 = scalar_select %p55, %s54, 0
    %s57 = smul.u32 4, %s56
    %p58 = scmp.lt.s32.totalorder %s57, 3
    %s59 = scalar_select %p58, %s57, 3
    %s60 = smul.addr %s59, 8
    %s61 = scalar_lea.vmem %s3, %s60
    %s62 = sadd.s32 0, 0
    %p63 = scmp.lt.s32.totalorder %s62, 0
    %s64 = scalar_select %p63, %s62, 0
    %s65 = smul.u32 4, %s64
  $region17: #{proposal_loss.1} parent=0 // pred_fallthru
    _
  // Predicated region
  $region18: #{proposal_loss.1} parent=0 // pred_check
    _
  $region19: #{proposal_loss.1} parent=0 // pred_check_branch
    %67 = sbr.rel (0) target = $region21
  $region20: #{proposal_loss.1} parent=0 // pred_region
    %s68 = sadd.s32 0, 0
    %p69 = scmp.lt.s32.totalorder %s68, 0
    %s70 = scalar_select %p69, %s68, 0
    %s71 = smul.u32 4, %s70
    %p72 = scmp.lt.s32.totalorder %s71, 3
    %s73 = scalar_select %p72, %s71, 3
    %s74 = smul.addr %s73, 4
    %s75 = scalar_lea.vmem %s4, %s74
    %s76 = sadd.s32 0, 0
    %p77 = scmp.lt.s32.totalorder %s76, 0
    %s78 = scalar_select %p77, %s76, 0
    %s79 = smul.u32 4, %s78
  $region21: #{proposal_loss.1} parent=0 // pred_fallthru
    _
  %s80 = sadd.s32 0, 0
  %p81 = scmp.lt.s32.totalorder %s80, 0
  %s82 = scalar_select %p81, %s80, 0
  %s83 = smul.u32 4, %s82
  %p84 = scmp.lt.s32.totalorder %s83, 3
  %s85 = scalar_select %p84, %s83, 3
  %s86 = smul.addr %s85, 2
  %s87 = smul.addr %s86, 2
  %s88 = scalar_lea.vmem %s0, %s87
  %s89 = sadd.s32 0, 0
  %p90 = scmp.lt.s32.totalorder %s89, 0
  %s91 = scalar_select %p90, %s89, 0
  %s92 = smul.u32 4, %s91
  %p93 = scmp.lt.s32.totalorder %s92, 3
  %s94 = scalar_select %p93, %s92, 3
  %s95 = scalar_lea.vmem %s1, %s94
  %s96 = sadd.s32 0, 0
  %p97 = scmp.lt.s32.totalorder %s96, 0
  %s98 = scalar_select %p97, %s96, 0
  %s99 = smul.u32 4, %s98
  %p100 = scmp.lt.s32.totalorder %s99, 3
  %s101 = scalar_select %p100, %s99, 3
  %s102 = smul.addr %s101, 8
  %s103 = scalar_lea.vmem %s2, %s102
  %s104 = sadd.s32 0, 0
  %p105 = scmp.lt.s32.totalorder %s104, 0
  %s106 = scalar_select %p105, %s104, 0
  %s107 = smul.u32 4, %s106
  %p108 = scmp.lt.s32.totalorder %s107, 3
  %s109 = scalar_select %p108, %s107, 3
  %s110 = smul.addr %s109, 8
  %s111 = scalar_lea.vmem %s3, %s110
  %s112 = sadd.s32 0, 0
  %p113 = scmp.lt.s32.totalorder %s112, 0
  %s114 = scalar_select %p113, %s112, 0
  %s115 = smul.u32 4, %s114
  %p116 = scmp.lt.s32.totalorder %s115, 3
  %s117 = scalar_select %p116, %s115, 3
  %s118 = smul.addr %s117, 4
  %s119 = scalar_lea.vmem %s4, %s118
  %s120 = sadd.s32 0, 0
  %p121 = scmp.lt.s32.totalorder %s120, 0
  %s122 = scalar_select %p121, %s120, 0
  %s123 = smul.u32 4, %s122
  %p124 = scmp.lt.s32.totalorder %s123, 3
  %s125 = scalar_select %p124, %s123, 3
  %s126 = smul.addr %s125, 2
  %s127 = smul.addr %s126, 2
  %s128 = scalar_lea.vmem %s0, %s127
  %s129 = sadd.s32 0, 0
  %p130 = scmp.lt.s32.totalorder %s129, 0
  %s131 = scalar_select %p130, %s129, 0
  %s132 = smul.u32 4, %s131
  %s133 = sadd.s32 0, 0
  %p134 = scmp.lt.s32.totalorder %s133, 0
  %s135 = scalar_select %p134, %s133, 0
  %s136 = smul.u32 4, %s135
  %p137 = scmp.lt.s32.totalorder %s136, 3
  %s138 = scalar_select %p137, %s136, 3
  %s139 = scalar_lea.vmem %s1, %s138
  %s140 = sadd.s32 0, 0
  %p141 = scmp.lt.s32.totalorder %s140, 0
  %s142 = scalar_select %p141, %s140, 0
  %s143 = smul.u32 4, %s142
  %s144 = sadd.s32 0, 0
  %p145 = scmp.lt.s32.totalorder %s144, 0
  %s146 = scalar_select %p145, %s144, 0
  %s147 = smul.u32 4, %s146
  %p148 = scmp.lt.s32.totalorder %s147, 3
  %s149 = scalar_select %p148, %s147, 3
  %s150 = smul.addr %s149, 8
  %s151 = scalar_lea.vmem %s2, %s150
  %s152 = sadd.s32 0, 0
  %p153 = scmp.lt.s32.totalorder %s152, 0
  %s154 = scalar_select %p153, %s152, 0
  %s155 = smul.u32 4, %s154
  %s156 = sadd.s32 0, 0
  %p157 = scmp.lt.s32.totalorder %s156, 0
  %s158 = scalar_select %p157, %s156, 0
  %s159 = smul.u32 4, %s158
  %p160 = scmp.lt.s32.totalorder %s159, 3
  %s161 = scalar_select %p160, %s159, 3
  %s162 = smul.addr %s161, 8
  %s163 = scalar_lea.vmem %s3, %s162
  %s164 = sadd.s32 0, 0
  %p165 = scmp.lt.s32.totalorder %s164, 0
  %s166 = scalar_select %p165, %s164, 0
  %s167 = smul.u32 4, %s166
  %s168 = sadd.s32 0, 0
  %p169 = scmp.lt.s32.totalorder %s168, 0
  %s170 = scalar_select %p169, %s168, 0
  %s171 = smul.u32 4, %s170
  %p172 = scmp.lt.s32.totalorder %s171, 3
  %s173 = scalar_select %p172, %s171, 3
  %s174 = smul.addr %s173, 4
  %s175 = scalar_lea.vmem %s4, %s174
  %s176 = sadd.s32 0, 0
  %p177 = scmp.lt.s32.totalorder %s176, 0
  %s178 = scalar_select %p177, %s176, 0
  %s179 = smul.u32 4, %s178
  %s180 = sadd.s32 0, 0
  %p181 = scmp.eq.s32.totalorder 0, 0
  // Predicated region
  $region22: #{proposal_loss.1} parent=0 // pred_check
    %p182 = pneg %p181
  $region23: #{proposal_loss.1} parent=0 // pred_check_branch
    %184 = sbr.rel (%p182) target = $region25
  $region24: #{proposal_loss.1} parent=0 // pred_region
    %185 = vst [vmem:[%s5] sm:$0x1] 0.0
    %186 = vst [vmem:[%s5 + $0x1] sm:$0x1] 0.0
    %187 = vst [vmem:[%s5 + $0x2] sm:$0x1] 0.0
  $region25: #{proposal_loss.1} parent=0 // pred_fallthru
    _
  %p188 = scmp.lt.s32.totalorder %s180, 1
  %v189 = vld [vmem:[%s128] sm:$0x3]
  %v190 = vld [vmem:[%s128 + $0x2] sm:$0x3]
  %v191 = vld [vmem:[%s128 + $0x4] sm:$0x3]
  %v192 = vld [vmem:[%s128 + $0x6] sm:$0x3]
  %v193 = vld [vmem:[%s128 + $0x8] sm:$0x3]
  %v194 = vld [vmem:[%s128 + $0xa] sm:$0x3]
  %v195 = vld [vmem:[%s128 + $0xc] sm:$0x3]
  %v196 = vld [vmem:[%s128 + $0xe] sm:$0x3]
  %v197 = vld [vmem:[%s139] sm:$0x1]
  %v198 = vld [vmem:[%s139 + $0x1] sm:$0x1]
  %v199 = vld [vmem:[%s139 + $0x2] sm:$0x1]
  %v200 = vld [vmem:[%s139 + $0x3] sm:$0x1]
  %v201 = vunpack.c.0.s8 %v197
  %v202 = vunpack.c.0.s8 %v198
  %v203 = vunpack.c.0.s8 %v199
  %v204 = vunpack.c.0.s8 %v200
  %vm205 = vcmp.ne.s32.totalorder %v201, 4294967295
  %vm206 = vcmp.ne.s32.totalorder %v202, 4294967295
  %vm207 = vcmp.ne.s32.totalorder %v203, 4294967295
  %vm208 = vcmp.ne.s32.totalorder %v204, 4294967295
  %s209 = scalar_select %p188, 1, 0
  %v210 = vstv %s209
  %vm211 = vcmp.eq.s32.totalorder %v210, 1
  %vm212 = vmand %vm205, %vm211
  %vm213 = vmand %vm206, %vm211
  %vm214 = vmand %vm207, %vm211
  %vm215 = vmand %vm208, %vm211
  %vm216 = vcmp.eq.s32.totalorder %v201, 1
  %vm217 = vcmp.eq.s32.totalorder %v202, 1
  %vm218 = vcmp.eq.s32.totalorder %v203, 1
  %vm219 = vcmp.eq.s32.totalorder %v204, 1
  %v220 = vsub.f32 %v189, %v190
  %v221 = vsub.f32 %v191, %v192
  %v222 = vsub.f32 %v193, %v194
  %v223 = vsub.f32 %v195, %v196
  %v224 = vsub.f32 %v190, %v189
  %v225 = vsub.f32 %v192, %v191
  %v226 = vsub.f32 %v194, %v193
  %v227 = vsub.f32 %v196, %v195
  %v228 = vsel %vm216, %v220, %v224
  %v229 = vsel %vm217, %v221, %v225
  %v230 = vsel %vm218, %v222, %v226
  %v231 = vsel %vm219, %v223, %v227
  %v232 = vmax.f32 %v228, 0.0
  %v233 = vmax.f32 %v229, 0.0
  %v234 = vmax.f32 %v230, 0.0
  %v235 = vmax.f32 %v231, 0.0
  %v236 = vand.u32 2147483647, %v228
  %v237 = vand.u32 2147483647, %v229
  %v238 = vand.u32 2147483647, %v230
  %v239 = vand.u32 2147483647, %v231
  %v240 = vsub.f32 0.0, %v236
  %v241 = vsub.f32 0.0, %v237
  %v242 = vsub.f32 0.0, %v238
  %v243 = vsub.f32 0.0, %v239
  %v244 = vmul.f32 %v240, 1.442695
  %v245 = vpow.pop %v244
  %v246 = vmul.f32 %v241, 1.442695
  %v247 = vpow.pop %v246
  %v248 = vmul.f32 %v242, 1.442695
  %v249 = vpow.pop %v248
  %v250 = vmul.f32 %v243, 1.442695
  %v251 = vpow.pop %v250
  %v252 = vadd.f32 %v245, 1.0
  %v253 = vadd.f32 %v247, 1.0
  %v254 = vadd.f32 %v249, 1.0
  %v255 = vadd.f32 %v251, 1.0
  %v256 = vlog2.pop %v252
  %v257 = vmul.f32 %v256, 0.6931472
  %v258 = vlog2.pop %v253
  %v259 = vmul.f32 %v258, 0.6931472
  %v260 = vlog2.pop %v254
  %v261 = vmul.f32 %v260, 0.6931472
  %v262 = vlog2.pop %v255
  %v263 = vmul.f32 %v262, 0.6931472
  %v264 = vadd.f32 %v232, %v257
  %v265 = vadd.f32 %v233, %v259
  %v266 = vadd.f32 %v234, %v261
  %v267 = vadd.f32 %v235, %v263
  %v268 = vsel %vm212, %v264, 0.0
  %v269 = vsel %vm213, %v265, 0.0
  %v270 = vsel %vm214, %v266, 0.0
  %v271 = vsel %vm215, %v267, 0.0
  %v272 = vsel %vm212, 1, 0
  %v273 = vsel %vm213, 1, 0
  %v274 = vsel %vm214, 1, 0
  %v275 = vsel %vm215, 1, 0
  %v276 = vcvt.s32.f32 %v272
  %v277 = vcvt.s32.f32 %v273
  %v278 = vcvt.s32.f32 %v274
  %v279 = vcvt.s32.f32 %v275
  %s280 = smul.u32 %s180, 32
  %s281 = ssub.s32 32, %s280
  %p282 = scmp.gt.s32.totalorder %s281, 0
  %s283 = scalar_select %p282, %s281, 0
  %p284 = scmp.lt.s32.totalorder %s283, 32
  %s285 = scalar_select %p284, %s283, 32
  %v286 = vlaneseq
  %v287 = vshrl.u32 %v286, 7
  %v288 = vadd.s32 %v287, 8
  %v289 = vadd.s32 %v287, 16
  %v290 = vadd.s32 %v287, 24
  %v291 = vstv %s285
  %vm292 = vcmp.lt.s32.totalorder %v287, %v291
  %vm293 = vcmp.lt.s32.totalorder %v288, %v291
  %vm294 = vcmp.lt.s32.totalorder %v289, %v291
  %vm295 = vcmp.lt.s32.totalorder %v290, %v291
  %v296 = vld [vmem:[%s163] sm:$0xff]
  %v297 = vld [vmem:[%s163 + $0x8] sm:$0xff]
  %v298 = vld [vmem:[%s163 + $0x10] sm:$0xff]
  %v299 = vld [vmem:[%s163 + $0x18] sm:$0xff]
  %v300 = vld [vmem:[%s151] sm:$0xff]
  %v301 = vld [vmem:[%s151 + $0x8] sm:$0xff]
  %v302 = vld [vmem:[%s151 + $0x10] sm:$0xff]
  %v303 = vld [vmem:[%s151 + $0x18] sm:$0xff]
  %v304 = vsub.f32 %v296, %v300
  %v305 = vsub.f32 %v297, %v301
  %v306 = vsub.f32 %v298, %v302
  %v307 = vsub.f32 %v299, %v303
  %v308 = vand.u32 2147483647, %v304
  %v309 = vand.u32 2147483647, %v305
  %v310 = vand.u32 2147483647, %v306
  %v311 = vand.u32 2147483647, %v307
  %v312 = vld [vmem:[%s175] sm:$0xf]
  %v313 = vld [vmem:[%s175 + $0x4] sm:$0xf]
  %v314 = vld [vmem:[%s175 + $0x8] sm:$0xf]
  %v315 = vld [vmem:[%s175 + $0xc] sm:$0xf]
  %v316 = vunpack.c.l.bf16 %v312
  %v317 = vunpack.c.l.bf16 %v313
  %v318 = vunpack.c.l.bf16 %v314
  %v319 = vunpack.c.l.bf16 %v315
  %v320 = vmul.f32 %v308, %v316
  %v321 = vmul.f32 %v309, %v317
  %v322 = vmul.f32 %v310, %v318
  %v323 = vmul.f32 %v311, %v319
  %vm324 = vcmp.lt.f32.partialorder %v320, 0.11111111
  %vm325 = vcmp.lt.f32.partialorder %v321, 0.11111111
  %vm326 = vcmp.lt.f32.partialorder %v322, 0.11111111
  %vm327 = vcmp.lt.f32.partialorder %v323, 0.11111111
  %v328 = vmul.f32 %v320, 4.5
  %v329 = vmul.f32 %v321, 4.5
  %v330 = vmul.f32 %v322, 4.5
  %v331 = vmul.f32 %v323, 4.5
  %v332 = vmul.f32 %v328, %v320
  %v333 = vmul.f32 %v329, %v321
  %v334 = vmul.f32 %v330, %v322
  %v335 = vmul.f32 %v331, %v323
  %v336 = vsub.f32 %v320, 0.055555556
  %v337 = vsub.f32 %v321, 0.055555556
  %v338 = vsub.f32 %v322, 0.055555556
  %v339 = vsub.f32 %v323, 0.055555556
  %v340 = vsel %vm324, %v332, %v336
  %v341 = vsel %vm325, %v333, %v337
  %v342 = vsel %vm326, %v334, %v338
  %v343 = vsel %vm327, %v335, %v339
  %v344 = vsel %vm292, %v340, 0.0
  %v345 = vsel %vm293, %v341, 0.0
  %v346 = vsel %vm294, %v342, 0.0
  %v347 = vsel %vm295, %v343, 0.0
  %v348 = vld [vmem:[%s5] sm:$0x1]
  %vm349 = vcmask 1041408
  %v350 = vsel %vm349, %v268, 0.0
  %v351 = vsel %vm349, %v269, 0.0
  %v352 = vadd.f32 %v350, %v351
  %v353 = vsel %vm349, %v270, 0.0
  %v354 = vadd.f32 %v352, %v353
  %v355 = vsel %vm349, %v271, 0.0
  %v356 = vadd.f32 %v354, %v355
  %v357 = vsel %vm349, %v356, 0.0
  %v358 = vrot.slane %v357, 4
  %v359 = vadd.f32 %v357, %v358
  %v360 = vrot.slane %v359, 2
  %v361 = vadd.f32 %v359, %v360
  %v362 = vrot.slane %v361, 1
  %v363 = vadd.f32 %v361, %v362
  %v364 = vadd.f32 %v348, %v363
  %365 = vst [vmem:[%s5] sm:$0x1] %v364
  %s366 = scalar_lea.vmem %s5, 1
  %v367 = vld [vmem:[%s366] sm:$0x1]
  %v368 = vsel %vm349, %v276, 0.0
  %v369 = vsel %vm349, %v277, 0.0
  %v370 = vadd.f32 %v368, %v369
  %v371 = vsel %vm349, %v278, 0.0
  %v372 = vadd.f32 %v370, %v371
  %v373 = vsel %vm349, %v279, 0.0
  %v374 = vadd.f32 %v372, %v373
  %v375 = vsel %vm349, %v374, 0.0
  %v376 = vrot.slane %v375, 4
  %v377 = vadd.f32 %v375, %v376
  %v378 = vrot.slane %v377, 2
  %v379 = vadd.f32 %v377, %v378
  %v380 = vrot.slane %v379, 1
  %v381 = vadd.f32 %v379, %v380
  %v382 = vadd.f32 %v367, %v381
  %383 = vst [vmem:[%s366] sm:$0x1] %v382
  %s384 = scalar_lea.vmem %s5, 2
  %v385 = vld [vmem:[%s384] sm:$0x1]
  %v386 = vadd.f32 %v344, %v345
  %v387 = vadd.f32 %v386, %v346
  %v388 = vadd.f32 %v387, %v347
  %v389 = vrot.slane %v388, 4
  %v390 = vadd.f32 %v388, %v389
  %v391 = vrot.slane %v390, 2
  %v392 = vadd.f32 %v390, %v391
  %v393 = vrot.slane %v392, 1
  %v394 = vadd.f32 %v392, %v393
  %v395 = vadd.f32 %v385, %v394
  %396 = vst [vmem:[%s384] sm:$0x1] %v395
  // Predicated region
  $region26: #{proposal_loss.1} parent=0 // pred_check
    _
  $region27: #{proposal_loss.1} parent=0 // pred_check_branch
    %398 = sbr.rel (0) target = $region29
  $region28: #{proposal_loss.1} parent=0 // pred_region
    _
  $region29: #{proposal_loss.1} parent=0 // pred_fallthru
    _
  // Predicated region
  $region30: #{proposal_loss.1} parent=0 // pred_check
    _
  $region31: #{proposal_loss.1} parent=0 // pred_check_branch
    %400 = sbr.rel (0) target = $region33
  $region32: #{proposal_loss.1} parent=0 // pred_region
    _
  $region33: #{proposal_loss.1} parent=0 // pred_fallthru
    _

</llo_original>
